<compile_context>
chip_gen: v5e
topology: v5e:2x2
jax: 0.10.0
libtpu: 0.0.40
codegen_flags: <defaults>
</compile_context>

<pallas_src>
import numpy as np
import jax
import jax.numpy as jnp
from jax.experimental import pallas as pl
from jax.experimental.pallas import tpu as pltpu

_NEG_BIG = -1.0e30  # finite "-inf": keeps alpha*0 / delta*0 NaN-free on the first D chunk


def _distill_loss_kernel(temps_ref, s_ref, t_ref, o_ref,
                         m_t_ref, z_t_ref, m_s_ref, z_s_ref, dot_ref):
    """One (batch tile, D chunk) step of the ncrops=2 DINO distillation loss.

    temps_ref : SMEM (2,) f32   -> [1/student_temp, 1/teacher_temp(epoch)]
    s_ref     : VMEM (2, TM, TD) student logits, crop 0 / crop 1, same batch rows
    t_ref     : VMEM (2, TM, TD) teacher logits
    o_ref     : VMEM (TM, 1) f32 per-row (loss01 + loss10); written on the last D chunk
    scratch (VMEM (2, TM, 1) f32, carried across the D grid axis):
      m_t/z_t : running max / partition of the scaled teacher row
      m_s/z_s : running max / partition of the scaled student row
      dot     : dot[i] = sum_d exp(t_i - m_t_i) * (s_j - m_s_j), with j = 1 - i
    """
    k = pl.program_id(1)

    @pl.when(k == 0)
    def _init():
        m_t_ref[...] = jnp.full_like(m_t_ref, _NEG_BIG)
        m_s_ref[...] = jnp.full_like(m_s_ref, _NEG_BIG)
        z_t_ref[...] = jnp.zeros_like(z_t_ref)
        z_s_ref[...] = jnp.zeros_like(z_s_ref)
        dot_ref[...] = jnp.zeros_like(dot_ref)

    inv_s_temp = temps_ref[0]
    inv_t_temp = temps_ref[1]

    # Temperature scale fused into the max shift (inv_temp > 0 commutes with max):
    # no standalone scaled full-width copy is kept live past this point.
    s_raw = s_ref[...].astype(jnp.float32)                      # (2, TM, TD)
    t_raw = t_ref[...].astype(jnp.float32)

    m_s_old = m_s_ref[...]                                      # (2, TM, 1)
    m_t_old = m_t_ref[...]
    m_s_new = jnp.maximum(m_s_old,
                          jnp.max(s_raw, axis=-1, keepdims=True) * inv_s_temp)
    m_t_new = jnp.maximum(m_t_old,
                          jnp.max(t_raw, axis=-1, keepdims=True) * inv_t_temp)

    s_sh = s_raw * inv_s_temp - m_s_new                         # shifted student logits
    t_exp = jnp.exp(t_raw * inv_t_temp - m_t_new)               # unnormalized teacher probs

    # Online-softmax rescale of the running stats for the new maxes.
    alpha_t = jnp.exp(m_t_old - m_t_new)                        # (2, TM, 1)
    alpha_s = jnp.exp(m_s_old - m_s_new)
    delta_s = m_s_old - m_s_new                                 # <= 0

    z_t_scaled = alpha_t * z_t_ref[...]
    z_t_new = z_t_scaled + jnp.sum(t_exp, axis=-1, keepdims=True)
    z_s_new = alpha_s * z_s_ref[...] + jnp.sum(jnp.exp(s_sh), axis=-1, keepdims=True)

    # Cross terms: re-shifted old part + this chunk's contribution.
    d01 = jnp.sum(t_exp[0] * s_sh[1], axis=-1, keepdims=True)   # (TM, 1)
    d10 = jnp.sum(t_exp[1] * s_sh[0], axis=-1, keepdims=True)
    dot0_new = alpha_t[0] * dot_ref[0] + delta_s[1] * z_t_scaled[0] + d01
    dot1_new = alpha_t[1] * dot_ref[1] + delta_s[0] * z_t_scaled[1] + d10

    m_t_ref[...] = m_t_new
    m_s_ref[...] = m_s_new
    z_t_ref[...] = z_t_new
    z_s_ref[...] = z_s_new
    dot_ref[0] = dot0_new
    dot_ref[1] = dot1_new

    @pl.when(k == pl.num_programs(1) - 1)
    def _finalize():
        # loss_ij = sum_d(-q_i * log_softmax(s_j)) = log_z_j - dot_ij / z_t_i.
        # Exact only because sum_d q_i == 1; revisit if teacher centering is ever added.
        inv_z_t = pl.reciprocal(z_t_ref[...], approx=False)     # (2, TM, 1)
        log_z_s = jnp.log(z_s_ref[...])
        loss01 = log_z_s[1] - dot_ref[0] * inv_z_t[0]
        loss10 = log_z_s[0] - dot_ref[1] * inv_z_t[1]
        o_ref[...] = (loss01 + loss10).astype(o_ref.dtype)


class DistillLossPallas:
    """Mirrors modeling/DGAD_net_method10.py::DistillLoss (ncrops fixed to 2).

    Notes:
      * `epoch` must be a static Python int (the teacher-temperature schedule is a
        host-side NumPy array); this wrapper is not jittable over a traced epoch.
      * bf16 or f32 logits are accepted as-is; do NOT pre-cast to f32 in the caller —
        the in-kernel astype keeps HBM traffic at the input dtype's width.
    """

    def __init__(self, warmup_teacher_temp_epochs, nepochs, ncrops=2,
                 warmup_teacher_temp=0.07, teacher_temp=0.04, student_temp=0.1,
                 max_block_rows=None, max_block_cols=None, input_buffer_count=2):
        assert ncrops == 2, "kernel implements the ncrops=2 (default) case"
        self.student_temp = student_temp
        self.ncrops = ncrops
        self.max_block_rows = max_block_rows
        self.max_block_cols = max_block_cols
        # input_buffer_count > 2 is only worth sweeping on v7x (higher per-TC HBM BW
        # can expose DMA issue latency); keep 2 on v5e / v6e.
        self.input_buffer_count = int(input_buffer_count)
        self.teacher_temp_schedule = np.concatenate((
            np.linspace(warmup_teacher_temp, teacher_temp, warmup_teacher_temp_epochs),
            np.ones(nepochs - warmup_teacher_temp_epochs) * teacher_temp,
        ))

    # ---------------- tiling / VMEM accounting ----------------

    @staticmethod
    def _vmem_capacity_bytes():
        try:
            cap = int(getattr(pltpu.get_tpu_info(), "vmem_capacity_bytes", 0))
            if cap > 0:
                return cap
        except Exception:
            pass
        return 64 << 20   # conservative (v7x-sized) fallback

    @staticmethod
    def _choose_tiles(b, d, itemsize, budget, n_buf, max_block_rows, max_block_cols):
        """Pick (TM rows, TD feature-chunk) so one grid step's VMEM footprint
        (student + teacher inputs x 2 crops x n_buf pipeline buffers plus ~24 B/elem of
        live f32 intermediates) stays within `budget`."""
        sub = 8                              # (8, 128) block-divisibility rule
        pref = 16 if itemsize < 4 else 8     # bf16 packs 2 rows / sublane -> prefer 16
        bytes_per_elem = 2 * 2 * n_buf * itemsize + 24

        # Feature axis: stream 128-multiple chunks when a full-width block would pin
        # TM below ~128 rows (DINO out_dim is 32k-65k).
        target_rows = 128
        td_cap = d if max_block_cols is None else min(d, int(max_block_cols))
        full_ok = (bytes_per_elem * d * target_rows <= budget) or d <= 1024
        if td_cap >= d and full_ok:
            td = d
        else:
            cap = min(td_cap, max(128, budget // (bytes_per_elem * target_rows)))
            cap = (int(cap) // 128) * 128
            td = 0
            for cand in range(cap, 0, -128):
                if d % cand == 0:
                    td = cand
                    break
            if td == 0:
                # TODO(synk): mask a ragged last chunk instead of full-width fallback.
                td = d

        # Batch axis.
        tm = int(budget // (bytes_per_elem * td))
        if max_block_rows is not None:
            tm = min(tm, int(max_block_rows))
        tm = min(tm, b)
        if b >= 4 * sub:
            tm = min(tm, b // 4)             # >= 4 batch tiles so both v7x TCs get work
        tm = (tm // pref) * pref if tm >= pref else (tm // sub) * sub
        tm = max(tm, sub)
        while tm > sub and b % tm != 0:
            tm -= sub
        if b % tm != 0:
            tm = b                           # full-extent block (legal, no batch pipelining)
        return tm, td

    # ---------------- forward ----------------

    def __call__(self, student_output, teacher_output, epoch):
        n, d = student_output.shape
        assert n % 2 == 0 and teacher_output.shape == (n, d)
        b = n // 2

        t_temp = float(self.teacher_temp_schedule[int(epoch)])
        inv_temps = jnp.array([1.0 / self.student_temp, 1.0 / t_temp], dtype=jnp.float32)

        # Crop-paired layout [2, B, D]: free reshape of the row-major [2B, D]
        # (rows [0:B] are crop 0, rows [B:2B] are crop 1, matching torch.chunk).
        s3 = student_output.reshape(2, b, d)
        t3 = teacher_output.reshape(2, b, d)

        itemsize = jnp.dtype(student_output.dtype).itemsize
        n_buf = self.input_buffer_count

        # Generation-aware tile budget: ~3/8 of physical VMEM, capped at 48 MiB
        # (v7x: 64 MiB -> 24 MiB; v5e/v6e: 128 MiB -> 48 MiB).
        vmem_cap = self._vmem_capacity_bytes()
        budget = min((vmem_cap * 3) // 8, 48 << 20)

        tm, td = self._choose_tiles(b, d, itemsize, budget, n_buf,
                                    self.max_block_rows, self.max_block_cols)
        grid = (b // tm, d // td)

        # Explicit scoped-VMEM limit sized to the actual footprint (the 16 / 32 MiB
        # defaults on v5e / v6e+v7x would otherwise reject large-but-legal tiles).
        footprint = (2 * 2 * n_buf * tm * td * itemsize   # pipelined input buffers
                     + 24 * tm * td                        # live f32 chunk intermediates
                     + 5 * 2 * tm * 4 + tm * 4)            # running stats + output tile
        vmem_limit = int(min(vmem_cap, max(32 << 20, footprint + footprint // 2 + (4 << 20))))

        spec_kwargs = {}
        if n_buf != 2:
            spec_kwargs["pipeline_mode"] = pl.Buffered(n_buf)
        in_block = pl.BlockSpec((2, tm, td), lambda i, k: (0, i, k), **spec_kwargs)

        per_row = pl.pallas_call(
            _distill_loss_kernel,
            out_shape=jax.ShapeDtypeStruct((b, 1), jnp.float32),
            grid=grid,
            in_specs=[
                pl.BlockSpec(memory_space=pltpu.MemorySpace.SMEM),  # inverse temperatures
                in_block,                                           # student (both crops)
                in_block,                                           # teacher (both crops)
            ],
            # Per-row partials; block index constant along the D axis -> stays resident
            # and is stored once per batch tile (on the last D chunk).
            out_specs=pl.BlockSpec((tm, 1), lambda i, k: (i, 0)),
            scratch_shapes=[pltpu.VMEM((2, tm, 1), jnp.float32) for _ in range(5)],
            compiler_params=pltpu.CompilerParams(
                dimension_semantics=("parallel", "arbitrary"),
                vmem_limit_bytes=vmem_limit,
            ),
        )(inv_temps, s3, t3)

        # total = (mean_b loss01 + mean_b loss10) / 2 = sum_b(loss01 + loss10) / (2*B)
        return jnp.sum(per_row) / (2.0 * b)


def _reference_loss(student_output, teacher_output, epoch, module):
    # pure-JAX reference mirroring the PyTorch forward
    s = student_output / module.student_temp
    temp = module.teacher_temp_schedule[int(epoch)]
    q = jax.nn.softmax(teacher_output / temp, axis=-1)
    b = student_output.shape[0] // 2
    s0, s1 = s[:b], s[b:]
    q0, q1 = q[:b], q[b:]
    l01 = jnp.mean(jnp.sum(-q0 * jax.nn.log_softmax(s1, axis=-1), axis=-1))
    l10 = jnp.mean(jnp.sum(-q1 * jax.nn.log_softmax(s0, axis=-1), axis=-1))
    return (l01 + l10) / 2.0


if __name__ == "__main__":
    B, D = 16, 256          # student / teacher outputs are [2*B, D]
    epoch = 3

    key = jax.random.PRNGKey(0)
    k1, k2 = jax.random.split(key)
    student = jax.random.normal(k1, (2 * B, D), dtype=jnp.float32)
    teacher = jax.random.normal(k2, (2 * B, D), dtype=jnp.float32)

    # Batch-tiled, single D chunk: TM=8 -> grid (2, 1).
    loss_mod = DistillLossPallas(warmup_teacher_temp_epochs=5, nepochs=10,
                                 max_block_rows=8)
    loss = loss_mod(student, teacher, epoch)
    jax.block_until_ready(loss)
    ref = _reference_loss(student, teacher, epoch, loss_mod)
    assert jnp.allclose(loss, ref, rtol=1e-5, atol=1e-5), (loss, ref)

    # D-streaming path: TD=128 -> grid (2, 2); exercises the online-softmax recurrence.
    loss_mod_stream = DistillLossPallas(warmup_teacher_temp_epochs=5, nepochs=10,
                                        max_block_rows=8, max_block_cols=128)
    loss_s = loss_mod_stream(student, teacher, epoch)
    jax.block_until_ready(loss_s)
    assert jnp.allclose(loss_s, ref, rtol=1e-5, atol=1e-5), (loss_s, ref)

    print("KERNEL_OK")
</pallas_src>

<mosaic_0001>
module attributes {stable_mosaic.version = 11 : i64} {
  func.func @_distill_loss_kernel(%arg0: i32, %arg1: i32, %arg2: memref<2xf32, #tpu.memory_space<smem>>, %arg3: memref<2x8x256xf32, #tpu.memory_space<vmem>>, %arg4: memref<2x8x256xf32, #tpu.memory_space<vmem>>, %arg5: memref<8x1xf32, #tpu.memory_space<vmem>>, %arg6: memref<2x8x1xf32, #tpu.memory_space<vmem>>, %arg7: memref<2x8x1xf32, #tpu.memory_space<vmem>>, %arg8: memref<2x8x1xf32, #tpu.memory_space<vmem>>, %arg9: memref<2x8x1xf32, #tpu.memory_space<vmem>>, %arg10: memref<2x8x1xf32, #tpu.memory_space<vmem>>) attributes {dimension_semantics = [#tpu.dimension_semantics<parallel>, #tpu.dimension_semantics<arbitrary>], iteration_bounds = array<i64: 2, 1>, scalar_prefetch = 0 : i64, scratch_operands = 5 : i64, tpu.core_type = #tpu.core_type<tc>, window_params = [{transform_indices = @transform_0, window_bounds = array<i64: 2>}, {transform_indices = @transform_1, window_bounds = array<i64: 2, 8, 256>}, {transform_indices = @transform_2, window_bounds = array<i64: 2, 8, 256>}, {transform_indices = @transform_3, window_bounds = array<i64: 8, 1>}]} {
    %c0_i32 = arith.constant 0 : i32
    %0 = arith.cmpi eq, %arg1, %c0_i32 : i32
    %1 = arith.extui %0 : i1 to i32
    %c0_i32_0 = arith.constant 0 : i32
    %2 = arith.cmpi ne, %1, %c0_i32_0 : i32
    scf.if %2 {
      %cst_50 = arith.constant -1.000000e+30 : f32
      %95 = vector.broadcast %cst_50 : f32 to vector<2x8x1xf32>
      %c0_51 = arith.constant 0 : index
      %c0_52 = arith.constant 0 : index
      %c0_53 = arith.constant 0 : index
      %96 = vector.load %arg6[%c0_51, %c0_52, %c0_53] : memref<2x8x1xf32, #tpu.memory_space<vmem>>, vector<2x8x1xf32>
      tpu.vector_store %arg6[%c0_51, %c0_52, %c0_53], %95 {strides = array<i32>} : memref<2x8x1xf32, #tpu.memory_space<vmem>>, vector<2x8x1xf32>,
      %cst_54 = arith.constant -1.000000e+30 : f32
      %97 = vector.broadcast %cst_54 : f32 to vector<2x8x1xf32>
      %c0_55 = arith.constant 0 : index
      %c0_56 = arith.constant 0 : index
      %c0_57 = arith.constant 0 : index
      %98 = vector.load %arg8[%c0_55, %c0_56, %c0_57] : memref<2x8x1xf32, #tpu.memory_space<vmem>>, vector<2x8x1xf32>
      tpu.vector_store %arg8[%c0_55, %c0_56, %c0_57], %97 {strides = array<i32>} : memref<2x8x1xf32, #tpu.memory_space<vmem>>, vector<2x8x1xf32>,
      %cst_58 = arith.constant 0.000000e+00 : f32
      %99 = vector.broadcast %cst_58 : f32 to vector<2x8x1xf32>
      %c0_59 = arith.constant 0 : index
      %c0_60 = arith.constant 0 : index
      %c0_61 = arith.constant 0 : index
      %100 = vector.load %arg7[%c0_59, %c0_60, %c0_61] : memref<2x8x1xf32, #tpu.memory_space<vmem>>, vector<2x8x1xf32>
      tpu.vector_store %arg7[%c0_59, %c0_60, %c0_61], %99 {strides = array<i32>} : memref<2x8x1xf32, #tpu.memory_space<vmem>>, vector<2x8x1xf32>,
      %cst_62 = arith.constant 0.000000e+00 : f32
      %101 = vector.broadcast %cst_62 : f32 to vector<2x8x1xf32>
      %c0_63 = arith.constant 0 : index
      %c0_64 = arith.constant 0 : index
      %c0_65 = arith.constant 0 : index
      %102 = vector.load %arg9[%c0_63, %c0_64, %c0_65] : memref<2x8x1xf32, #tpu.memory_space<vmem>>, vector<2x8x1xf32>
      tpu.vector_store %arg9[%c0_63, %c0_64, %c0_65], %101 {strides = array<i32>} : memref<2x8x1xf32, #tpu.memory_space<vmem>>, vector<2x8x1xf32>,
      %cst_66 = arith.constant 0.000000e+00 : f32
      %103 = vector.broadcast %cst_66 : f32 to vector<2x8x1xf32>
      %c0_67 = arith.constant 0 : index
      %c0_68 = arith.constant 0 : index
      %c0_69 = arith.constant 0 : index
      %104 = vector.load %arg10[%c0_67, %c0_68, %c0_69] : memref<2x8x1xf32, #tpu.memory_space<vmem>>, vector<2x8x1xf32>
      tpu.vector_store %arg10[%c0_67, %c0_68, %c0_69], %103 {strides = array<i32>} : memref<2x8x1xf32, #tpu.memory_space<vmem>>, vector<2x8x1xf32>,
    } else {
    }
    %c0 = arith.constant 0 : index
    %3 = memref.load %arg2[%c0] : memref<2xf32, #tpu.memory_space<smem>>
    %c1 = arith.constant 1 : index
    %4 = memref.load %arg2[%c1] : memref<2xf32, #tpu.memory_space<smem>>
    %c0_1 = arith.constant 0 : index
    %c0_2 = arith.constant 0 : index
    %c0_3 = arith.constant 0 : index
    %5 = vector.load %arg3[%c0_1, %c0_2, %c0_3] : memref<2x8x256xf32, #tpu.memory_space<vmem>>, vector<2x8x256xf32>
    %c0_4 = arith.constant 0 : index
    %c0_5 = arith.constant 0 : index
    %c0_6 = arith.constant 0 : index
    %6 = vector.load %arg4[%c0_4, %c0_5, %c0_6] : memref<2x8x256xf32, #tpu.memory_space<vmem>>, vector<2x8x256xf32>
    %c0_7 = arith.constant 0 : index
    %c0_8 = arith.constant 0 : index
    %c0_9 = arith.constant 0 : index
    %7 = vector.load %arg8[%c0_7, %c0_8, %c0_9] : memref<2x8x1xf32, #tpu.memory_space<vmem>>, vector<2x8x1xf32>
    %c0_10 = arith.constant 0 : index
    %c0_11 = arith.constant 0 : index
    %c0_12 = arith.constant 0 : index
    %8 = vector.load %arg6[%c0_10, %c0_11, %c0_12] : memref<2x8x1xf32, #tpu.memory_space<vmem>>, vector<2x8x1xf32>
    %cst = arith.constant dense<0xFF800000> : vector<2x8xf32>
    %9 = vector.multi_reduction <maximumf>, %5, %cst [2] : vector<2x8x256xf32> to vector<2x8xf32>
    %10 = vector.shape_cast %9 : vector<2x8xf32> to vector<2x8x1xf32>
    %11 = vector.broadcast %3 : f32 to vector<2x8x1xf32>
    %12 = arith.mulf %10, %11 : vector<2x8x1xf32>
    %13 = arith.maximumf %7, %12 : vector<2x8x1xf32>
    %cst_13 = arith.constant dense<0xFF800000> : vector<2x8xf32>
    %14 = vector.multi_reduction <maximumf>, %6, %cst_13 [2] : vector<2x8x256xf32> to vector<2x8xf32>
    %15 = vector.shape_cast %14 : vector<2x8xf32> to vector<2x8x1xf32>
    %16 = vector.broadcast %4 : f32 to vector<2x8x1xf32>
    %17 = arith.mulf %15, %16 : vector<2x8x1xf32>
    %18 = arith.maximumf %8, %17 : vector<2x8x1xf32>
    %19 = vector.broadcast %3 : f32 to vector<2x8x256xf32>
    %20 = arith.mulf %5, %19 : vector<2x8x256xf32>
    %21 = vector.broadcast %13 : vector<2x8x1xf32> to vector<2x8x256xf32>
    %22 = arith.subf %20, %21 : vector<2x8x256xf32>
    %23 = vector.broadcast %4 : f32 to vector<2x8x256xf32>
    %24 = arith.mulf %6, %23 : vector<2x8x256xf32>
    %25 = vector.broadcast %18 : vector<2x8x1xf32> to vector<2x8x256xf32>
    %26 = arith.subf %24, %25 : vector<2x8x256xf32>
    %27 = math.exp %26 : vector<2x8x256xf32>
    %28 = arith.subf %8, %18 : vector<2x8x1xf32>
    %29 = math.exp %28 : vector<2x8x1xf32>
    %30 = arith.subf %7, %13 : vector<2x8x1xf32>
    %31 = math.exp %30 : vector<2x8x1xf32>
    %32 = arith.subf %7, %13 : vector<2x8x1xf32>
    %c0_14 = arith.constant 0 : index
    %c0_15 = arith.constant 0 : index
    %c0_16 = arith.constant 0 : index
    %33 = vector.load %arg7[%c0_14, %c0_15, %c0_16] : memref<2x8x1xf32, #tpu.memory_space<vmem>>, vector<2x8x1xf32>
    %34 = arith.mulf %29, %33 : vector<2x8x1xf32>
    %cst_17 = arith.constant dense<0.000000e+00> : vector<2x8xf32>
    %35 = vector.multi_reduction <add>, %27, %cst_17 [2] : vector<2x8x256xf32> to vector<2x8xf32>
    %36 = vector.shape_cast %35 : vector<2x8xf32> to vector<2x8x1xf32>
    %37 = arith.addf %34, %36 : vector<2x8x1xf32>
    %c0_18 = arith.constant 0 : index
    %c0_19 = arith.constant 0 : index
    %c0_20 = arith.constant 0 : index
    %38 = vector.load %arg9[%c0_18, %c0_19, %c0_20] : memref<2x8x1xf32, #tpu.memory_space<vmem>>, vector<2x8x1xf32>
    %39 = arith.mulf %31, %38 : vector<2x8x1xf32>
    %40 = math.exp %22 : vector<2x8x256xf32>
    %cst_21 = arith.constant dense<0.000000e+00> : vector<2x8xf32>
    %41 = vector.multi_reduction <add>, %40, %cst_21 [2] : vector<2x8x256xf32> to vector<2x8xf32>
    %42 = vector.shape_cast %41 : vector<2x8xf32> to vector<2x8x1xf32>
    %43 = arith.addf %39, %42 : vector<2x8x1xf32>
    %44 = vector.extract_strided_slice %27 {offsets = [0, 0, 0], sizes = [1, 8, 256], strides = [1, 1, 1]} : vector<2x8x256xf32> to vector<1x8x256xf32>
    %45 = vector.shape_cast %44 : vector<1x8x256xf32> to vector<8x256xf32>
    %46 = vector.extract_strided_slice %22 {offsets = [1, 0, 0], sizes = [1, 8, 256], strides = [1, 1, 1]} : vector<2x8x256xf32> to vector<1x8x256xf32>
    %47 = vector.shape_cast %46 : vector<1x8x256xf32> to vector<8x256xf32>
    %48 = arith.mulf %45, %47 : vector<8x256xf32>
    %cst_22 = arith.constant dense<0.000000e+00> : vector<8xf32>
    %49 = vector.multi_reduction <add>, %48, %cst_22 [1] : vector<8x256xf32> to vector<8xf32>
    %50 = vector.shape_cast %49 : vector<8xf32> to vector<8x1xf32>
    %51 = vector.extract_strided_slice %27 {offsets = [1, 0, 0], sizes = [1, 8, 256], strides = [1, 1, 1]} : vector<2x8x256xf32> to vector<1x8x256xf32>
    %52 = vector.shape_cast %51 : vector<1x8x256xf32> to vector<8x256xf32>
    %53 = vector.extract_strided_slice %22 {offsets = [0, 0, 0], sizes = [1, 8, 256], strides = [1, 1, 1]} : vector<2x8x256xf32> to vector<1x8x256xf32>
    %54 = vector.shape_cast %53 : vector<1x8x256xf32> to vector<8x256xf32>
    %55 = arith.mulf %52, %54 : vector<8x256xf32>
    %cst_23 = arith.constant dense<0.000000e+00> : vector<8xf32>
    %56 = vector.multi_reduction <add>, %55, %cst_23 [1] : vector<8x256xf32> to vector<8xf32>
    %57 = vector.shape_cast %56 : vector<8xf32> to vector<8x1xf32>
    %58 = vector.extract_strided_slice %29 {offsets = [0, 0, 0], sizes = [1, 8, 1], strides = [1, 1, 1]} : vector<2x8x1xf32> to vector<1x8x1xf32>
    %59 = vector.shape_cast %58 : vector<1x8x1xf32> to vector<8x1xf32>
    %c0_24 = arith.constant 0 : index
    %c0_25 = arith.constant 0 : index
    %c0_26 = arith.constant 0 : index
    %60 = vector.load %arg10[%c0_24, %c0_25, %c0_26] : memref<2x8x1xf32, #tpu.memory_space<vmem>>, vector<1x8x1xf32>
    %61 = vector.shape_cast %60 : vector<1x8x1xf32> to vector<8x1xf32>
    %62 = arith.mulf %59, %61 : vector<8x1xf32>
    %63 = vector.extract_strided_slice %32 {offsets = [1, 0, 0], sizes = [1, 8, 1], strides = [1, 1, 1]} : vector<2x8x1xf32> to vector<1x8x1xf32>
    %64 = vector.shape_cast %63 : vector<1x8x1xf32> to vector<8x1xf32>
    %65 = vector.extract_strided_slice %34 {offsets = [0, 0, 0], sizes = [1, 8, 1], strides = [1, 1, 1]} : vector<2x8x1xf32> to vector<1x8x1xf32>
    %66 = vector.shape_cast %65 : vector<1x8x1xf32> to vector<8x1xf32>
    %67 = arith.mulf %64, %66 : vector<8x1xf32>
    %68 = arith.addf %62, %67 : vector<8x1xf32>
    %69 = arith.addf %68, %50 : vector<8x1xf32>
    %70 = vector.extract_strided_slice %29 {offsets = [1, 0, 0], sizes = [1, 8, 1], strides = [1, 1, 1]} : vector<2x8x1xf32> to vector<1x8x1xf32>
    %71 = vector.shape_cast %70 : vector<1x8x1xf32> to vector<8x1xf32>
    %c1_27 = arith.constant 1 : index
    %c0_28 = arith.constant 0 : index
    %c0_29 = arith.constant 0 : index
    %72 = vector.load %arg10[%c1_27, %c0_28, %c0_29] : memref<2x8x1xf32, #tpu.memory_space<vmem>>, vector<1x8x1xf32>
    %73 = vector.shape_cast %72 : vector<1x8x1xf32> to vector<8x1xf32>
    %74 = arith.mulf %71, %73 : vector<8x1xf32>
    %75 = vector.extract_strided_slice %32 {offsets = [0, 0, 0], sizes = [1, 8, 1], strides = [1, 1, 1]} : vector<2x8x1xf32> to vector<1x8x1xf32>
    %76 = vector.shape_cast %75 : vector<1x8x1xf32> to vector<8x1xf32>
    %77 = vector.extract_strided_slice %34 {offsets = [1, 0, 0], sizes = [1, 8, 1], strides = [1, 1, 1]} : vector<2x8x1xf32> to vector<1x8x1xf32>
    %78 = vector.shape_cast %77 : vector<1x8x1xf32> to vector<8x1xf32>
    %79 = arith.mulf %76, %78 : vector<8x1xf32>
    %80 = arith.addf %74, %79 : vector<8x1xf32>
    %81 = arith.addf %80, %57 : vector<8x1xf32>
    %c0_30 = arith.constant 0 : index
    %c0_31 = arith.constant 0 : index
    %c0_32 = arith.constant 0 : index
    %82 = vector.load %arg6[%c0_30, %c0_31, %c0_32] : memref<2x8x1xf32, #tpu.memory_space<vmem>>, vector<2x8x1xf32>
    tpu.vector_store %arg6[%c0_30, %c0_31, %c0_32], %18 {strides = array<i32>} : memref<2x8x1xf32, #tpu.memory_space<vmem>>, vector<2x8x1xf32>,
    %c0_33 = arith.constant 0 : index
    %c0_34 = arith.constant 0 : index
    %c0_35 = arith.constant 0 : index
    %83 = vector.load %arg8[%c0_33, %c0_34, %c0_35] : memref<2x8x1xf32, #tpu.memory_space<vmem>>, vector<2x8x1xf32>
    tpu.vector_store %arg8[%c0_33, %c0_34, %c0_35], %13 {strides = array<i32>} : memref<2x8x1xf32, #tpu.memory_space<vmem>>, vector<2x8x1xf32>,
    %c0_36 = arith.constant 0 : index
    %c0_37 = arith.constant 0 : index
    %c0_38 = arith.constant 0 : index
    %84 = vector.load %arg7[%c0_36, %c0_37, %c0_38] : memref<2x8x1xf32, #tpu.memory_space<vmem>>, vector<2x8x1xf32>
    tpu.vector_store %arg7[%c0_36, %c0_37, %c0_38], %37 {strides = array<i32>} : memref<2x8x1xf32, #tpu.memory_space<vmem>>, vector<2x8x1xf32>,
    %c0_39 = arith.constant 0 : index
    %c0_40 = arith.constant 0 : index
    %c0_41 = arith.constant 0 : index
    %85 = vector.load %arg9[%c0_39, %c0_40, %c0_41] : memref<2x8x1xf32, #tpu.memory_space<vmem>>, vector<2x8x1xf32>
    tpu.vector_store %arg9[%c0_39, %c0_40, %c0_41], %43 {strides = array<i32>} : memref<2x8x1xf32, #tpu.memory_space<vmem>>, vector<2x8x1xf32>,
    %c0_42 = arith.constant 0 : index
    %c0_43 = arith.constant 0 : index
    %c0_44 = arith.constant 0 : index
    %86 = vector.load %arg10[%c0_42, %c0_43, %c0_44] : memref<2x8x1xf32, #tpu.memory_space<vmem>>, vector<1x8x1xf32>
    %87 = vector.shape_cast %86 : vector<1x8x1xf32> to vector<8x1xf32>
    %88 = vector.shape_cast %69 : vector<8x1xf32> to vector<1x8x1xf32>
    tpu.vector_store %arg10[%c0_42, %c0_43, %c0_44], %88 {strides = array<i32>} : memref<2x8x1xf32, #tpu.memory_space<vmem>>, vector<1x8x1xf32>,
    %c1_45 = arith.constant 1 : index
    %c0_46 = arith.constant 0 : index
    %c0_47 = arith.constant 0 : index
    %89 = vector.load %arg10[%c1_45, %c0_46, %c0_47] : memref<2x8x1xf32, #tpu.memory_space<vmem>>, vector<1x8x1xf32>
    %90 = vector.shape_cast %89 : vector<1x8x1xf32> to vector<8x1xf32>
    %91 = vector.shape_cast %81 : vector<8x1xf32> to vector<1x8x1xf32>
    tpu.vector_store %arg10[%c1_45, %c0_46, %c0_47], %91 {strides = array<i32>} : memref<2x8x1xf32, #tpu.memory_space<vmem>>, vector<1x8x1xf32>,
    %c0_i32_48 = arith.constant 0 : i32
    %92 = arith.cmpi eq, %arg1, %c0_i32_48 : i32
    %93 = arith.extui %92 : i1 to i32
    %c0_i32_49 = arith.constant 0 : i32
    %94 = arith.cmpi ne, %93, %c0_i32_49 : i32
    scf.if %94 {
      %c0_50 = arith.constant 0 : index
      %c0_51 = arith.constant 0 : index
      %c0_52 = arith.constant 0 : index
      %95 = vector.load %arg7[%c0_50, %c0_51, %c0_52] : memref<2x8x1xf32, #tpu.memory_space<vmem>>, vector<2x8x1xf32>
      %96 = tpu.reciprocal %95 : vector<2x8x1xf32> -> vector<2x8x1xf32>
      %c0_53 = arith.constant 0 : index
      %c0_54 = arith.constant 0 : index
      %c0_55 = arith.constant 0 : index
      %97 = vector.load %arg9[%c0_53, %c0_54, %c0_55] : memref<2x8x1xf32, #tpu.memory_space<vmem>>, vector<2x8x1xf32>
      %98 = math.log %97 : vector<2x8x1xf32>
      %99 = vector.extract_strided_slice %98 {offsets = [1, 0, 0], sizes = [1, 8, 1], strides = [1, 1, 1]} : vector<2x8x1xf32> to vector<1x8x1xf32>
      %100 = vector.shape_cast %99 : vector<1x8x1xf32> to vector<8x1xf32>
      %c0_56 = arith.constant 0 : index
      %c0_57 = arith.constant 0 : index
      %c0_58 = arith.constant 0 : index
      %101 = vector.load %arg10[%c0_56, %c0_57, %c0_58] : memref<2x8x1xf32, #tpu.memory_space<vmem>>, vector<1x8x1xf32>
      %102 = vector.shape_cast %101 : vector<1x8x1xf32> to vector<8x1xf32>
      %103 = vector.extract_strided_slice %96 {offsets = [0, 0, 0], sizes = [1, 8, 1], strides = [1, 1, 1]} : vector<2x8x1xf32> to vector<1x8x1xf32>
      %104 = vector.shape_cast %103 : vector<1x8x1xf32> to vector<8x1xf32>
      %105 = arith.mulf %102, %104 : vector<8x1xf32>
      %106 = arith.subf %100, %105 : vector<8x1xf32>
      %107 = vector.extract_strided_slice %98 {offsets = [0, 0, 0], sizes = [1, 8, 1], strides = [1, 1, 1]} : vector<2x8x1xf32> to vector<1x8x1xf32>
      %108 = vector.shape_cast %107 : vector<1x8x1xf32> to vector<8x1xf32>
      %c1_59 = arith.constant 1 : index
      %c0_60 = arith.constant 0 : index
      %c0_61 = arith.constant 0 : index
      %109 = vector.load %arg10[%c1_59, %c0_60, %c0_61] : memref<2x8x1xf32, #tpu.memory_space<vmem>>, vector<1x8x1xf32>
      %110 = vector.shape_cast %109 : vector<1x8x1xf32> to vector<8x1xf32>
      %111 = vector.extract_strided_slice %96 {offsets = [1, 0, 0], sizes = [1, 8, 1], strides = [1, 1, 1]} : vector<2x8x1xf32> to vector<1x8x1xf32>
      %112 = vector.shape_cast %111 : vector<1x8x1xf32> to vector<8x1xf32>
      %113 = arith.mulf %110, %112 : vector<8x1xf32>
      %114 = arith.subf %108, %113 : vector<8x1xf32>
      %115 = arith.addf %106, %114 : vector<8x1xf32>
      %c0_62 = arith.constant 0 : index
      %c0_63 = arith.constant 0 : index
      %116 = vector.load %arg5[%c0_62, %c0_63] : memref<8x1xf32, #tpu.memory_space<vmem>>, vector<8x1xf32>
      tpu.vector_store %arg5[%c0_62, %c0_63], %115 {strides = array<i32>} : memref<8x1xf32, #tpu.memory_space<vmem>>, vector<8x1xf32>,
    } else {
    }
    return
  }
  func.func @transform_0(%arg0: i32, %arg1: i32) -> i32 {
    %c0_i32 = arith.constant 0 : i32
    %c0_i32_0 = arith.constant 0 : i32
    return %c0_i32 : i32
  }
  func.func @transform_1(%arg0: i32, %arg1: i32) -> (i32, i32, i32) {
    %c0_i32 = arith.constant 0 : i32
    %c0_i32_0 = arith.constant 0 : i32
    return %c0_i32, %arg0, %arg1 : i32, i32, i32
  }
  func.func @transform_2(%arg0: i32, %arg1: i32) -> (i32, i32, i32) {
    %c0_i32 = arith.constant 0 : i32
    %c0_i32_0 = arith.constant 0 : i32
    return %c0_i32, %arg0, %arg1 : i32, i32, i32
  }
  func.func @transform_3(%arg0: i32, %arg1: i32) -> (i32, i32) {
    %c0_i32 = arith.constant 0 : i32
    %c0_i32_0 = arith.constant 0 : i32
    return %arg0, %c0_i32 : i32, i32
  }
}

</mosaic_0001>

<llo_original>
// kernel: tpu_custom_call.1
$region0: #{tpu_custom_call.1}
  #allocation0 [shape = 'u32[]', space=smem, size = 0x4, offset = 0x4, fixed_abs, tag = 'smem constant byte address 0x4 - core index']
  #allocation1 [shape = 'u32[72,128]{1,0:T(1,128)}', space=vmem, size = 0x9000, scoped, tag = 'internal scratch']
  #allocation2 [shape = 'f32[2,8,1]{2,1,0:T(8,128)}', space=vmem, size = 0x2000, scoped, tag = 'scratch operand']
  #allocation3 [shape = 'f32[2,8,1]{2,1,0:T(8,128)}', space=vmem, size = 0x2000, scoped, tag = 'scratch operand']
  #allocation4 [shape = 'f32[2,8,1]{2,1,0:T(8,128)}', space=vmem, size = 0x2000, scoped, tag = 'scratch operand']
  #allocation5 [shape = 'f32[2,8,1]{2,1,0:T(8,128)}', space=vmem, size = 0x2000, scoped, tag = 'scratch operand']
  #allocation6 [shape = 'f32[2,8,1]{2,1,0:T(8,128)}', space=vmem, size = 0x2000, scoped, tag = 'scratch operand']
  %s0 = inlined_call_operand.hbm [shape: f32[2], index: 0, kind: input, shape index: {}]
  %s1 = inlined_call_operand.hbm [shape: f32[2,16,256], index: 1, kind: input, shape index: {}]
  %s2 = inlined_call_operand.hbm [shape: f32[2,16,256], index: 2, kind: input, shape index: {}]
  %s3 = inlined_call_operand.vmem [shape: f32[16,1], index: 3, kind: output, shape index: {}]
  %s4 = sld [smem:[#allocation0]]
  $region65: #{tpu_custom_call.1} parent=0
    _
  %s6 = ssub.s32 1, %s4
  %s7 = scalar_select 0, %s6, %s4
  $region1: #{tpu_custom_call.1} parent=0
    #allocation7 [shape = 'u8[512]{0}', space=smem, size = 0x200, scoped, tag = 'input window, operand 0, single buffered']
    #allocation8 [shape = 's32[2]{0}', space=sflag, size = 0x8, scoped, tag = 'scoped memory for tpu_custom_call.1']
    #allocation9 [shape = 's32[2]{0}', space=sflag, size = 0x8, scoped, tag = 'scoped memory for tpu_custom_call.1']
    #allocation10 [shape = 'u8[32768]{0}', space=vmem, size = 0x8000, scoped, tag = 'input window, operand 1']
    #allocation11 [shape = 'u8[32768]{0}', space=vmem, size = 0x8000, scoped, tag = 'input window, operand 2']
    #allocation12 [shape = 's32[2]{0}', space=sflag, size = 0x8, scoped, tag = 'scoped memory for tpu_custom_call.1']
    %8 = vsyncpa [#allocation9], 0
    %9 = vsyncpa [#allocation8], 0
    %s10 = scalar_lea.sflag [#allocation8], 1
    %11 = vsyncpa %s10, 0
    %12 = vsyncpa [#allocation12], 0
    %s13 = scalar_lea.sflag [#allocation12], 1
    %14 = vsyncpa %s13, 0
    loop: start=0, step=1, limit=4
    $region2: #{tpu_custom_call.1} parent=1 // loop_pre_header
      _
    $region3: #{tpu_custom_call.1} parent=1 // loop_header
      %s16 = sphi 0, %s20
      %p17 = scmp.ge.s32.totalorder %s16, 4
      %s23 = sphi 0, %s35
      %s24 = sphi 0, %s31
      %s25 = sphi 0, %s23
      %s26 = sphi 0, %s24
      %s27 = sphi 0, %s25
      %s28 = sphi 0, %s26
      %s36 = sphi 0, %s36
      %s38 = sphi 0, %s36
      %s39 = sphi 0, %s38
      %s53 = sphi 0, %s39
      %s61 = sphi 0, %s63
      %s64 = sphi 0, %s61
      %s65 = sphi 0, %s64
      %s81 = sphi 0, %s65
      %s89 = sphi 0, %s91
      %s92 = sphi 0, %s89
      %s93 = sphi 0, %s92
      %s109 = sphi 0, %s93
      %s115 = sphi 0, %s117
      %s118 = sphi 0, %s115
      %s119 = sphi 0, %s118
      %s135 = sphi 0, %s119
    $region4: #{tpu_custom_call.1} parent=1 // loop_header_branch
      %19 = sbr.rel (%p17) target = $region8
    $region5: #{tpu_custom_call.1} parent=1 // loop_body
      %s21 = ssub.s32 %s16, 1
      %s22 = ssub.s32 %s16, 2
      %s29 = sadd.s32 1, %s24
      %p30 = scmp.ge.s32.totalorder %s29, 1
      %s31 = scalar_select %p30, 0, %s29
      %s32 = sadd.s32 1, %s23
      %s33 = scalar_select %p30, %s32, %s23
      %p34 = scmp.ge.s32.totalorder %s33, 2
      %s35 = scalar_select %p34, 0, %s33
      %s37 = sadd.s32 %s36, 1
      %p40 = scmp.eq.s32.totalorder %s16, 1
      %p41 = scmp.ne.s32.totalorder %s36, %s38
      %p42 = scmp.eq.s32.totalorder %s16, 0
      %p43 = por %p41, %p42
      %p44 = scmp.ne.s32.totalorder %s36, %s38
      %p45 = scmp.eq.s32.totalorder %s21, 1
      %p46 = por %p44, %p45
      %p47 = scmp.ne.s32.totalorder %s38, %s39
      %p48 = scmp.eq.s32.totalorder %s21, 0
      %p49 = por %p47, %p48
      %p50 = scmp.ne.s32.totalorder %s38, %s39
      %p51 = scmp.eq.s32.totalorder %s22, 1
      %p52 = por %p50, %p51
      %p54 = scmp.ne.s32.totalorder %s39, %s53
      %p55 = scmp.eq.s32.totalorder %s22, 0
      %p56 = por %p54, %p55
      %s57 = ssub.s32 %s23, %s35
      %s58 = ssub.s32 %s24, %s31
      %s59 = sor.u32 %s57, %s58
      %p60 = scmp.eq.s32.totalorder %s59, 0
      %s62 = sadd.s32 %s61, 1
      %s63 = scalar_select %p60, %s61, %s62
      %p66 = pneg %p60
      %p67 = scmp.eq.s32.totalorder %s16, 1
      %p68 = por %p66, %p67
      %p69 = scmp.ne.s32.totalorder %s61, %s64
      %p70 = scmp.eq.s32.totalorder %s16, 0
      %p71 = por %p69, %p70
      %p72 = scmp.ne.s32.totalorder %s61, %s64
      %p73 = scmp.eq.s32.totalorder %s21, 1
      %p74 = por %p72, %p73
      %p75 = scmp.ne.s32.totalorder %s64, %s65
      %p76 = scmp.eq.s32.totalorder %s21, 0
      %p77 = por %p75, %p76
      %p78 = scmp.ne.s32.totalorder %s64, %s65
      %p79 = scmp.eq.s32.totalorder %s22, 1
      %p80 = por %p78, %p79
      %p82 = scmp.ne.s32.totalorder %s65, %s81
      %p83 = scmp.eq.s32.totalorder %s22, 0
      %p84 = por %p82, %p83
      %s85 = ssub.s32 %s23, %s35
      %s86 = ssub.s32 %s24, %s31
      %s87 = sor.u32 %s85, %s86
      %p88 = scmp.eq.s32.totalorder %s87, 0
      %s90 = sadd.s32 %s89, 1
      %s91 = scalar_select %p88, %s89, %s90
      %p94 = pneg %p88
      %p95 = scmp.eq.s32.totalorder %s16, 1
      %p96 = por %p94, %p95
      %p97 = scmp.ne.s32.totalorder %s89, %s92
      %p98 = scmp.eq.s32.totalorder %s16, 0
      %p99 = por %p97, %p98
      %p100 = scmp.ne.s32.totalorder %s89, %s92
      %p101 = scmp.eq.s32.totalorder %s21, 1
      %p102 = por %p100, %p101
      %p103 = scmp.ne.s32.totalorder %s92, %s93
      %p104 = scmp.eq.s32.totalorder %s21, 0
      %p105 = por %p103, %p104
      %p106 = scmp.ne.s32.totalorder %s92, %s93
      %p107 = scmp.eq.s32.totalorder %s22, 1
      %p108 = por %p106, %p107
      %p110 = scmp.ne.s32.totalorder %s93, %s109
      %p111 = scmp.eq.s32.totalorder %s22, 0
      %p112 = por %p110, %p111
      %s113 = ssub.s32 %s23, %s35
      %p114 = scmp.eq.s32.totalorder %s113, 0
      %s116 = sadd.s32 %s115, 1
      %s117 = scalar_select %p114, %s115, %s116
      %p120 = pneg %p114
      %p121 = scmp.eq.s32.totalorder %s16, 1
      %p122 = por %p120, %p121
      %p123 = scmp.ne.s32.totalorder %s115, %s118
      %p124 = scmp.eq.s32.totalorder %s16, 0
      %p125 = por %p123, %p124
      %p126 = scmp.ne.s32.totalorder %s115, %s118
      %p127 = scmp.eq.s32.totalorder %s21, 1
      %p128 = por %p126, %p127
      %p129 = scmp.ne.s32.totalorder %s118, %s119
      %p130 = scmp.eq.s32.totalorder %s21, 0
      %p131 = por %p129, %p130
      %p132 = scmp.ne.s32.totalorder %s118, %s119
      %p133 = scmp.eq.s32.totalorder %s22, 1
      %p134 = por %p132, %p133
      %p136 = scmp.ne.s32.totalorder %s119, %s135
      %p137 = scmp.eq.s32.totalorder %s22, 0
      %p138 = por %p136, %p137
      %p139 = scmp.le.s32.totalorder 1, %s16
      %p140 = scmp.lt.s32.totalorder %s16, 3
      %p141 = pnand %p139, %p140
      %p142 = pneg %p141
      // Predicated region
      $region9: #{tpu_custom_call.1} parent=5 // pred_check
        _
      $region10: #{tpu_custom_call.1} parent=5 // pred_check_branch
        %144 = sbr.rel (%p141) target = $region12
      $region11: #{tpu_custom_call.1} parent=5 // pred_region
        %s145 = ssub.s32 %s16, 1
        // Predicated region
        $region13: #{tpu_custom_call.1} parent=11 // pred_check
          %p146 = pneg %p49
        $region14: #{tpu_custom_call.1} parent=11 // pred_check_branch
          %148 = sbr.rel (%p146) target = $region16
        $region15: #{tpu_custom_call.1} parent=11 // pred_region
          %150 = vsyncadd [#allocation9], 0
          %s152 = sshll.u32 %s0, 4
          %s153 = int_to_ptr.hbm [resolvable:$true] %s152
          %155 = dma.hbm_to_smem %s153, 16, [#allocation7], [#allocation9]
        $region16: #{tpu_custom_call.1} parent=11 // pred_fallthru
          _
      $region12: #{tpu_custom_call.1} parent=5 // pred_fallthru
        _
      %p156 = scmp.lt.s32.totalorder %s16, 2
      // Predicated region
      $region17: #{tpu_custom_call.1} parent=5 // pred_check
        %p157 = pneg %p156
      $region18: #{tpu_custom_call.1} parent=5 // pred_check_branch
        %159 = sbr.rel (%p157) target = $region20
      $region19: #{tpu_custom_call.1} parent=5 // pred_region
        // Predicated region
        $region21: #{tpu_custom_call.1} parent=19 // pred_check
          %p160 = pneg %p71
        $region22: #{tpu_custom_call.1} parent=19 // pred_check_branch
          %162 = sbr.rel (%p160) target = $region24
        $region23: #{tpu_custom_call.1} parent=19 // pred_region
          %s163 = sand.u32 %s61, 1
          %s164 = scalar_lea.sflag [#allocation8], %s163
          %s165 = sand.u32 %s61, 1
          %s166 = smul.addr %s165, 32
          %s167 = scalar_lea.vmem [#allocation10], %s166
          %s168 = smul.u32 2, %s24
          %170 = vsyncadd %s164, 0
          %s171 = smul.addr %s23, 2
          %s172 = sadd.s32 %s168, %s171
          %s173 = smul.addr %s172, 8
          %s174 = scalar_lea.hbm %s1, %s173
          %s175 = sshll.u32 %s174, 4
          %s176 = int_to_ptr.hbm [resolvable:$true] %s175
          %s177 = sshll.u32 %s167, 4
          %s178 = int_to_ptr.vmem [resolvable:$true] %s177
          %183 = dma.hbm_to_vmem [thread:$0]  %s176, 512, %s178, %s164, 512, 256, 16
        $region24: #{tpu_custom_call.1} parent=19 // pred_fallthru
          _
        // Predicated region
        $region25: #{tpu_custom_call.1} parent=19 // pred_check
          %p184 = pneg %p99
        $region26: #{tpu_custom_call.1} parent=19 // pred_check_branch
          %186 = sbr.rel (%p184) target = $region28
        $region27: #{tpu_custom_call.1} parent=19 // pred_region
          %s187 = sand.u32 %s89, 1
          %s188 = scalar_lea.sflag [#allocation12], %s187
          %s189 = sand.u32 %s89, 1
          %s190 = smul.addr %s189, 32
          %s191 = scalar_lea.vmem [#allocation11], %s190
          %s192 = smul.u32 2, %s24
          %194 = vsyncadd %s188, 0
          %s195 = smul.addr %s23, 2
          %s196 = sadd.s32 %s192, %s195
          %s197 = smul.addr %s196, 8
          %s198 = scalar_lea.hbm %s2, %s197
          %s199 = sshll.u32 %s198, 4
          %s200 = int_to_ptr.hbm [resolvable:$true] %s199
          %s201 = sshll.u32 %s191, 4
          %s202 = int_to_ptr.vmem [resolvable:$true] %s201
          %207 = dma.hbm_to_vmem [thread:$0]  %s200, 512, %s202, %s188, 512, 256, 16
        $region28: #{tpu_custom_call.1} parent=19 // pred_fallthru
          _
      $region20: #{tpu_custom_call.1} parent=5 // pred_fallthru
        _
      %p208 = scmp.le.s32.totalorder 1, %s16
      %p209 = scmp.lt.s32.totalorder %s16, 3
      %p210 = pnand %p208, %p209
      %p211 = pneg %p210
      // Predicated region
      $region29: #{tpu_custom_call.1} parent=5 // pred_check
        _
      $region30: #{tpu_custom_call.1} parent=5 // pred_check_branch
        %213 = sbr.rel (%p210) target = $region32
      $region31: #{tpu_custom_call.1} parent=5 // pred_region
        %s214 = ssub.s32 %s16, 1
        // Predicated region
        $region33: #{tpu_custom_call.1} parent=31 // pred_check
          %p215 = pneg %p49
        $region34: #{tpu_custom_call.1} parent=31 // pred_check_branch
          %217 = sbr.rel (%p215) target = $region36
        $region35: #{tpu_custom_call.1} parent=31 // pred_region
          %219 = dma.done [#allocation9], 16
        $region36: #{tpu_custom_call.1} parent=31 // pred_fallthru
          _
        %s220 = sand.u32 %s64, 1
        %s221 = scalar_lea.sflag [#allocation8], %s220
        %s222 = sand.u32 %s64, 1
        %s223 = smul.addr %s222, 32
        %s224 = scalar_lea.vmem [#allocation10], %s223
        // Predicated region
        $region37: #{tpu_custom_call.1} parent=31 // pred_check
          %p225 = pneg %p77
        $region38: #{tpu_custom_call.1} parent=31 // pred_check_branch
          %227 = sbr.rel (%p225) target = $region40
        $region39: #{tpu_custom_call.1} parent=31 // pred_region
          %229 = dma.done %s221, 512
        $region40: #{tpu_custom_call.1} parent=31 // pred_fallthru
          _
        %s230 = sand.u32 %s92, 1
        %s231 = scalar_lea.sflag [#allocation12], %s230
        %s232 = sand.u32 %s92, 1
        %s233 = smul.addr %s232, 32
        %s234 = scalar_lea.vmem [#allocation11], %s233
        // Predicated region
        $region41: #{tpu_custom_call.1} parent=31 // pred_check
          %p235 = pneg %p105
        $region42: #{tpu_custom_call.1} parent=31 // pred_check_branch
          %237 = sbr.rel (%p235) target = $region44
        $region43: #{tpu_custom_call.1} parent=31 // pred_region
          %239 = dma.done %s231, 512
        $region44: #{tpu_custom_call.1} parent=31 // pred_fallthru
          _
        %240 = sfence
        %p241 = pneg %p49
        %p242 = pneg %p46
        %s243 = sand.u32 %s64, 1
        %s244 = scalar_lea.sflag [#allocation8], %s243
        %s245 = sand.u32 %s64, 1
        %s246 = smul.addr %s245, 32
        %s247 = scalar_lea.vmem [#allocation10], %s246
        %p248 = pneg %p77
        %p249 = pneg %p74
        %s250 = sand.u32 %s92, 1
        %s251 = scalar_lea.sflag [#allocation12], %s250
        %s252 = sand.u32 %s92, 1
        %s253 = smul.addr %s252, 32
        %s254 = scalar_lea.vmem [#allocation11], %s253
        %p255 = pneg %p105
        %p256 = pneg %p102
        %p257 = pneg %p131
        %p258 = pneg %p128
        %p259 = scmp.lt.s32.totalorder %s25, 1
        %s260 = scalar_select %p259, %s25, 1
        %s261 = smul.addr %s260, 8
        %s262 = scalar_lea.vmem %s3, %s261
        %s263 = smul.u32 2, %s26
        %s264 = smul.u32 2, %s26
        %p265 = scmp.lt.s32.totalorder %s25, 1
        %s266 = scalar_select %p265, %s25, 1
        %s267 = smul.addr %s266, 8
        %s268 = scalar_lea.vmem %s3, %s267
        %p269 = scmp.eq.s32.totalorder %s26, 0
        // Predicated region
        $region45: #{tpu_custom_call.1} parent=31 // pred_check
          %p270 = pneg %p269
        $region46: #{tpu_custom_call.1} parent=31 // pred_check_branch
          %272 = sbr.rel (%p270) target = $region48
        $region47: #{tpu_custom_call.1} parent=31 // pred_region
          %vm273 = vcmask 7168
          %274 = vst.msk [vmem:[#allocation2] sm:$0xff] %vm273, -1e+30
          %275 = vst.msk [vmem:[#allocation2 + $0x8] sm:$0xff] %vm273, -1e+30
          %276 = vst.msk [vmem:[#allocation4] sm:$0xff] %vm273, -1e+30
          %277 = vst.msk [vmem:[#allocation4 + $0x8] sm:$0xff] %vm273, -1e+30
          %278 = vst.msk [vmem:[#allocation3] sm:$0xff] %vm273, 0.0
          %279 = vst.msk [vmem:[#allocation3 + $0x8] sm:$0xff] %vm273, 0.0
          %280 = vst.msk [vmem:[#allocation5] sm:$0xff] %vm273, 0.0
          %281 = vst.msk [vmem:[#allocation5 + $0x8] sm:$0xff] %vm273, 0.0
          %282 = vst.msk [vmem:[#allocation6] sm:$0xff] %vm273, 0.0
          %283 = vst.msk [vmem:[#allocation6 + $0x8] sm:$0xff] %vm273, 0.0
        $region48: #{tpu_custom_call.1} parent=31 // pred_fallthru
          _
        %s284 = sld [smem:[#allocation7]]
        %s285 = sld [smem:[#allocation7 + $0x1]]
        %v286 = vld [vmem:[%s224] sm:$0xff]
        %v287 = vld [vmem:[%s224 + $0x8] sm:$0xff]
        %v288 = vld [vmem:[%s224 + $0x10] sm:$0xff]
        %v289 = vld [vmem:[%s224 + $0x18] sm:$0xff]
        %v290 = vld [vmem:[%s234] sm:$0xff]
        %v291 = vld [vmem:[%s234 + $0x8] sm:$0xff]
        %v292 = vld [vmem:[%s234 + $0x10] sm:$0xff]
        %v293 = vld [vmem:[%s234 + $0x18] sm:$0xff]
        %v294 = vld [vmem:[#allocation4] sm:$0xff]
        %v295 = vld [vmem:[#allocation4 + $0x8] sm:$0xff]
        %v296 = vld [vmem:[#allocation2] sm:$0xff]
        %v297 = vld [vmem:[#allocation2 + $0x8] sm:$0xff]
        %v298 = vmax.f32 %v286, %v287
        %299 = vmax.xlane.f32.xlu0 %v298
        %v300 = vpop.xlane.xlu0 %299
        %v301 = vmax.f32 %v288, %v289
        %302 = vmax.xlane.f32.xlu0 %v301
        %v303 = vpop.xlane.xlu0 %302
        %v304 = vstv %s284
        %v305 = vmul.f32 %v300, %v304
        %v306 = vmul.f32 %v303, %v304
        %v307 = vmax.f32 %v294, %v305
        %v308 = vmax.f32 %v295, %v306
        %v309 = vmax.f32 %v290, %v291
        %310 = vmax.xlane.f32.xlu0 %v309
        %v311 = vpop.xlane.xlu0 %310
        %v312 = vmax.f32 %v292, %v293
        %313 = vmax.xlane.f32.xlu0 %v312
        %v314 = vpop.xlane.xlu0 %313
        %v315 = vstv %s285
        %v316 = vmul.f32 %v311, %v315
        %v317 = vmul.f32 %v314, %v315
        %v318 = vmax.f32 %v296, %v316
        %v319 = vmax.f32 %v297, %v317
        %v320 = vmul.f32 %v286, %v304
        %v321 = vmul.f32 %v287, %v304
        %v322 = vmul.f32 %v288, %v304
        %v323 = vmul.f32 %v289, %v304
        %325 = vset.pattern.permute.xlu0 0
        %326 = vperm.xlu0 %325, %v307
        %v327 = vpop.permute.xlu0 %326
        %330 = vset.pattern.permute.xlu0 0
        %331 = vperm.xlu0 %330, %v308
        %v332 = vpop.permute.xlu0 %331
        %v334 = vsub.f32 %v320, %v327
        %v335 = vsub.f32 %v321, %v327
        %v336 = vsub.f32 %v322, %v332
        %v337 = vsub.f32 %v323, %v332
        %v338 = vmul.f32 %v290, %v315
        %v339 = vmul.f32 %v291, %v315
        %v340 = vmul.f32 %v292, %v315
        %v341 = vmul.f32 %v293, %v315
        %343 = vset.pattern.permute.xlu0 0
        %344 = vperm.xlu0 %343, %v318
        %v345 = vpop.permute.xlu0 %344
        %348 = vset.pattern.permute.xlu0 0
        %349 = vperm.xlu0 %348, %v319
        %v350 = vpop.permute.xlu0 %349
        %v352 = vsub.f32 %v338, %v345
        %v353 = vsub.f32 %v339, %v345
        %v354 = vsub.f32 %v340, %v350
        %v355 = vsub.f32 %v341, %v350
        %v356 = vmul.f32 %v352, 1.442695
        %v357 = vpow.pop %v356
        %v358 = vmul.f32 %v353, 1.442695
        %v359 = vpow.pop %v358
        %v360 = vmul.f32 %v354, 1.442695
        %v361 = vpow.pop %v360
        %v362 = vmul.f32 %v355, 1.442695
        %v363 = vpow.pop %v362
        %v364 = vsub.f32 %v296, %v318
        %v365 = vsub.f32 %v297, %v319
        %v366 = vmul.f32 %v364, 1.442695
        %v367 = vpow.pop %v366
        %v368 = vmul.f32 %v365, 1.442695
        %v369 = vpow.pop %v368
        %v370 = vsub.f32 %v294, %v307
        %v371 = vsub.f32 %v295, %v308
        %v372 = vmul.f32 %v370, 1.442695
        %v373 = vpow.pop %v372
        %v374 = vmul.f32 %v371, 1.442695
        %v375 = vpow.pop %v374
        %v376 = vld [vmem:[#allocation3] sm:$0xff]
        %v377 = vld [vmem:[#allocation3 + $0x8] sm:$0xff]
        %v378 = vmul.f32 %v367, %v376
        %v379 = vmul.f32 %v369, %v377
        %v380 = vadd.f32 %v357, %v359
        %381 = vadd.xlane.f32.xlu0 %v380
        %v382 = vpop.xlane.xlu0 %381
        %v383 = vadd.f32 %v361, %v363
        %384 = vadd.xlane.f32.xlu0 %v383
        %v385 = vpop.xlane.xlu0 %384
        %v386 = vadd.f32 %v378, %v382
        %v387 = vadd.f32 %v379, %v385
        %v388 = vld [vmem:[#allocation5] sm:$0xff]
        %v389 = vld [vmem:[#allocation5 + $0x8] sm:$0xff]
        %v390 = vmul.f32 %v373, %v388
        %v391 = vmul.f32 %v375, %v389
        %v392 = vmul.f32 %v334, 1.442695
        %v393 = vpow.pop %v392
        %v394 = vmul.f32 %v335, 1.442695
        %v395 = vpow.pop %v394
        %v396 = vmul.f32 %v336, 1.442695
        %v397 = vpow.pop %v396
        %v398 = vmul.f32 %v337, 1.442695
        %v399 = vpow.pop %v398
        %v400 = vadd.f32 %v393, %v395
        %401 = vadd.xlane.f32.xlu0 %v400
        %v402 = vpop.xlane.xlu0 %401
        %v403 = vadd.f32 %v397, %v399
        %404 = vadd.xlane.f32.xlu0 %v403
        %v405 = vpop.xlane.xlu0 %404
        %v406 = vadd.f32 %v390, %v402
        %v407 = vadd.f32 %v391, %v405
        %v408 = vmul.f32 %v357, %v336
        %v409 = vmul.f32 %v359, %v337
        %v410 = vadd.f32 %v408, %v409
        %411 = vadd.xlane.f32.xlu0 %v410
        %v412 = vpop.xlane.xlu0 %411
        %v413 = vmul.f32 %v361, %v334
        %v414 = vmul.f32 %v363, %v335
        %v415 = vadd.f32 %v413, %v414
        %416 = vadd.xlane.f32.xlu0 %v415
        %v417 = vpop.xlane.xlu0 %416
        %v418 = vld [vmem:[#allocation6] sm:$0xff]
        %v419 = vmul.f32 %v367, %v418
        %v420 = vmul.f32 %v371, %v378
        %v421 = vadd.f32 %v419, %v420
        %v422 = vadd.f32 %v421, %v412
        %s423 = scalar_lea.vmem [#allocation6], 8
        %v424 = vld [vmem:[%s423] sm:$0xff]
        %v425 = vmul.f32 %v369, %v424
        %v426 = vmul.f32 %v370, %v379
        %v427 = vadd.f32 %v425, %v426
        %v428 = vadd.f32 %v427, %v417
        %vm429 = vcmask 7168
        %430 = vst.msk [vmem:[#allocation2] sm:$0xff] %vm429, %v318
        %431 = vst.msk [vmem:[#allocation2 + $0x8] sm:$0xff] %vm429, %v319
        %432 = vst.msk [vmem:[#allocation4] sm:$0xff] %vm429, %v307
        %433 = vst.msk [vmem:[#allocation4 + $0x8] sm:$0xff] %vm429, %v308
        %434 = vst.msk [vmem:[#allocation3] sm:$0xff] %vm429, %v386
        %435 = vst.msk [vmem:[#allocation3 + $0x8] sm:$0xff] %vm429, %v387
        %436 = vst.msk [vmem:[#allocation5] sm:$0xff] %vm429, %v406
        %437 = vst.msk [vmem:[#allocation5 + $0x8] sm:$0xff] %vm429, %v407
        %438 = vst.msk [vmem:[#allocation6] sm:$0xff] %vm429, %v422
        %439 = vst.msk [vmem:[%s423] sm:$0xff] %vm429, %v428
        // Predicated region
        $region49: #{tpu_custom_call.1} parent=31 // pred_check
          %p440 = pneg %p269
        $region50: #{tpu_custom_call.1} parent=31 // pred_check_branch
          %442 = sbr.rel (%p440) target = $region52
        $region51: #{tpu_custom_call.1} parent=31 // pred_region
          %v443 = vld [vmem:[#allocation3] sm:$0xff]
          %v444 = vld [vmem:[#allocation3 + $0x8] sm:$0xff]
          %v445 = vrcp.pop %v443
          %v446 = vmul.f32 %v443, %v445
          %v447 = vsub.f32 1.0, %v446
          %v448 = vmul.f32 %v445, %v447
          %v449 = vadd.f32 %v445, %v448
          %vm450 = vweird.f32 %v443
          %vm451 = vweird.f32 %v445
          %vm452 = vmor %vm450, %vm451
          %v453 = vsel %vm452, %v445, %v449
          %v454 = vand.u32 2147483647, %v443
          %vm455 = vcmp.eq.f32.partialorder %v454, 8.507059e+37
          %v456 = vand.u32 %v443, 2147483648
          %v457 = vor.u32 1.1754944e-38, %v456
          %v458 = vsel %vm455, %v457, %v453
          %v459 = vrcp.pop %v444
          %v460 = vmul.f32 %v444, %v459
          %v461 = vsub.f32 1.0, %v460
          %v462 = vmul.f32 %v459, %v461
          %v463 = vadd.f32 %v459, %v462
          %vm464 = vweird.f32 %v444
          %vm465 = vweird.f32 %v459
          %vm466 = vmor %vm464, %vm465
          %v467 = vsel %vm466, %v459, %v463
          %v468 = vand.u32 2147483647, %v444
          %vm469 = vcmp.eq.f32.partialorder %v468, 8.507059e+37
          %v470 = vand.u32 %v444, 2147483648
          %v471 = vor.u32 1.1754944e-38, %v470
          %v472 = vsel %vm469, %v471, %v467
          %v473 = vld [vmem:[#allocation5] sm:$0xff]
          %v474 = vld [vmem:[#allocation5 + $0x8] sm:$0xff]
          %v475 = vlog2.pop %v473
          %v476 = vmul.f32 %v475, 0.6931472
          %v477 = vlog2.pop %v474
          %v478 = vmul.f32 %v477, 0.6931472
          %v479 = vld [vmem:[#allocation6] sm:$0xff]
          %v480 = vmul.f32 %v479, %v458
          %v481 = vsub.f32 %v478, %v480
          %v482 = vld [vmem:[%s423] sm:$0xff]
          %v483 = vmul.f32 %v482, %v472
          %v484 = vsub.f32 %v476, %v483
          %v485 = vadd.f32 %v481, %v484
          %486 = vst.msk [vmem:[%s268] sm:$0xff] %vm429, %v485
        $region52: #{tpu_custom_call.1} parent=31 // pred_fallthru
          _
        %p487 = scmp.lt.s32.totalorder %s25, 1
        %s488 = scalar_select %p487, %s25, 1
        %s489 = smul.addr %s488, 8
        %s490 = scalar_lea.vmem %s3, %s489
        // Predicated region
        $region53: #{tpu_custom_call.1} parent=31 // pred_check
          %p491 = pneg %p128
        $region54: #{tpu_custom_call.1} parent=31 // pred_check_branch
          %493 = sbr.rel (%p491) target = $region56
        $region55: #{tpu_custom_call.1} parent=31 // pred_region
          _
        $region56: #{tpu_custom_call.1} parent=31 // pred_fallthru
          _
      $region32: #{tpu_custom_call.1} parent=5 // pred_fallthru
        _
      %p494 = scmp.le.s32.totalorder 2, %s16
      // Predicated region
      $region57: #{tpu_custom_call.1} parent=5 // pred_check
        %p495 = pneg %p494
      $region58: #{tpu_custom_call.1} parent=5 // pred_check_branch
        %497 = sbr.rel (%p495) target = $region60
      $region59: #{tpu_custom_call.1} parent=5 // pred_region
        %s498 = ssub.s32 %s16, 2
        // Predicated region
        $region61: #{tpu_custom_call.1} parent=59 // pred_check
          %p499 = pneg %p134
        $region62: #{tpu_custom_call.1} parent=59 // pred_check_branch
          %501 = sbr.rel (%p499) target = $region64
        $region63: #{tpu_custom_call.1} parent=59 // pred_region
          %p502 = scmp.lt.s32.totalorder %s27, 1
          %s503 = scalar_select %p502, %s27, 1
          %s504 = smul.addr %s503, 8
          %s505 = scalar_lea.vmem %s3, %s504
        $region64: #{tpu_custom_call.1} parent=59 // pred_fallthru
          _
      $region60: #{tpu_custom_call.1} parent=5 // pred_fallthru
        _
    $region6: #{tpu_custom_call.1} parent=1 // loop_footer
      %s20 = sadd.s32 1, %s16
    $region7: #{tpu_custom_call.1} parent=1 // loop_footer_branch
      %15 = sbr.rel target = $region3
    $region8: #{tpu_custom_call.1} parent=1 // loop_exit
      _
    %506 = vsyncpa [#allocation8], 1
    %s507 = scalar_lea.sflag [#allocation8], 1
    %508 = vsyncpa %s507, 1
    %509 = vsyncpa [#allocation12], 1
    %s510 = scalar_lea.sflag [#allocation12], 1
    %511 = vsyncpa %s510, 1
    %512 = vsyncpa [#allocation9], 1
    %s513 = scalar_lea.sflag [#allocation9], 1
    %514 = vsyncpa %s513, 1

</llo_original>
